<compile_context>
chip_gen: v7x
topology: tpu7x:2x2x1
jax: 0.10.0
libtpu: 0.0.40
codegen_flags: <defaults>
</compile_context>

<pallas_src>
import jax
import jax.numpy as jnp
from jax.experimental import pallas as pl

LANE = 128


def gnn_kernel(a_ref, cola_ref, x_ref, w1_ref, b1_ref, w2_ref, b2_ref, out_ref):
    a = a_ref[...]                        # (N, N)  bf16, row-normalized adjacency
    x = x_ref[...]                        # (N, Fp) bf16, zero-padded features
    n = a_ref.shape[0]                    # static

    # ---- SAGEConv 1: mean aggregation + fused [Wl; Wr] matmul + bias + relu --
    agg1 = jnp.dot(a, x, preferred_element_type=jnp.float32)           # (N, Fp)
    z1 = jnp.concatenate([agg1.astype(jnp.bfloat16), x], axis=-1)      # (N, 2Fp)
    h1 = jnp.dot(z1, w1_ref[...], preferred_element_type=jnp.float32) + b1_ref[...]
    h1 = jnp.maximum(h1, 0.0)                                          # (N, Hp)

    # ---- SAGEConv 2 with the node-sum readout folded through it ------------
    # sum_i h2_i = sum_j [colA_j * h1_j, h1_j] @ [Wl2; Wr2] + N * b2
    z2 = jnp.concatenate([(cola_ref[...] * h1).astype(jnp.bfloat16),
                          h1.astype(jnp.bfloat16)], axis=-1)           # (N, 2Hp)
    rows = jnp.dot(z2, w2_ref[...], preferred_element_type=jnp.float32)  # (N, Cp)
    out_ref[...] = jnp.sum(rows, axis=0, keepdims=True) + n * b2_ref[...]  # (1, Cp)


def _round_up(n, m=LANE):
    return ((n + m - 1) // m) * m


def _pad2d(arr, rows, cols):
    r, c = arr.shape
    return jnp.pad(arr, ((0, rows - r), (0, cols - c)))


def init_params(key, in_channels, hidden_channels, out_channels):
    k = jax.random.split(key, 6)
    s1 = 1.0 / jnp.sqrt(in_channels)
    s2 = 1.0 / jnp.sqrt(hidden_channels)
    return {
        # layer 1: (in -> hidden)
        "wl1": jax.random.uniform(k[0], (in_channels, hidden_channels),
                                  jnp.float32, -s1, s1),
        "wr1": jax.random.uniform(k[1], (in_channels, hidden_channels),
                                  jnp.float32, -s1, s1),
        "b1": jax.random.uniform(k[2], (1, hidden_channels),
                                 jnp.float32, -s1, s1),
        # layer 2: (hidden -> out)
        "wl2": jax.random.uniform(k[3], (hidden_channels, out_channels),
                                  jnp.float32, -s2, s2),
        "wr2": jax.random.uniform(k[4], (hidden_channels, out_channels),
                                  jnp.float32, -s2, s2),
        "b2": jax.random.uniform(k[5], (1, out_channels),
                                 jnp.float32, -s2, s2),
    }


def gnn_forward(x, edge_index, params):
    """x: (N, F) float32 node features, edge_index: (2, E) int32 [src; dst]."""
    n, f = x.shape
    h = params["wl1"].shape[1]
    c = params["wl2"].shape[1]
    fp, hp, cp = _round_up(f), _round_up(h), _round_up(c)

    # ---- glue: row-normalized adjacency via one-hot matmuls (no scatter) ----
    src = edge_index[0]
    dst = edge_index[1]
    oh_src = jax.nn.one_hot(src, n, dtype=jnp.float32)      # (E, N)
    oh_dst = jax.nn.one_hot(dst, n, dtype=jnp.float32)      # (E, N)
    adj = oh_dst.T @ oh_src                                  # counts of j -> i
    deg = jnp.sum(adj, axis=1, keepdims=True)
    adj = adj / jnp.maximum(deg, 1.0)                        # mean agg; isolated -> 0
    col_a = jnp.sum(adj, axis=0)[:, None]                    # (N, 1) column sums

    # ---- pad channel dims to lane width, fuse [Wl; Wr], cast MXU inputs ----
    x_p = _pad2d(x, n, fp).astype(jnp.bfloat16)
    w1 = jnp.concatenate([_pad2d(params["wl1"], fp, hp),
                          _pad2d(params["wr1"], fp, hp)], axis=0).astype(jnp.bfloat16)
    b1 = _pad2d(params["b1"], 1, hp)
    w2 = jnp.concatenate([_pad2d(params["wl2"], hp, cp),
                          _pad2d(params["wr2"], hp, cp)], axis=0).astype(jnp.bfloat16)
    b2 = _pad2d(params["b2"], 1, cp)
    adj_b = adj.astype(jnp.bfloat16)

    out_p = pl.pallas_call(
        gnn_kernel,
        out_shape=jax.ShapeDtypeStruct((1, cp), jnp.float32),
    )(adj_b, col_a, x_p, w1, b1, w2, b2)

    return out_p[:, :c]                                      # (1, out_channels)


if __name__ == "__main__":
    N = 16            # number of graph nodes
    F = 8             # input feature channels
    HIDDEN = 32       # hidden_channels
    OUT = 10          # out_channels (forward reshapes to (1, 10))
    E = 48            # number of edges

    key = jax.random.PRNGKey(0)
    kx, ke1, ke2, kp = jax.random.split(key, 4)

    x = jax.random.normal(kx, (N, F), jnp.float32)
    src = jax.random.randint(ke1, (E,), 0, N, jnp.int32)
    dst = jax.random.randint(ke2, (E,), 0, N, jnp.int32)
    edge_index = jnp.stack([src, dst], axis=0)               # (2, E)

    params = init_params(kp, F, HIDDEN, OUT)

    out = jax.jit(gnn_forward)(x, edge_index, params)
    out = jax.block_until_ready(out)
    assert out.shape == (1, 10)
    print("KERNEL_OK")
</pallas_src>

<mosaic_0001>
module attributes {stable_mosaic.version = 11 : i64} {
  func.func @gnn_kernel(%arg0: memref<16x16xbf16, #tpu.memory_space<vmem>>, %arg1: memref<16x1xf32, #tpu.memory_space<vmem>>, %arg2: memref<16x128xbf16, #tpu.memory_space<vmem>>, %arg3: memref<256x128xbf16, #tpu.memory_space<vmem>>, %arg4: memref<1x128xf32, #tpu.memory_space<vmem>>, %arg5: memref<256x128xbf16, #tpu.memory_space<vmem>>, %arg6: memref<1x128xf32, #tpu.memory_space<vmem>>, %arg7: memref<1x128xf32, #tpu.memory_space<vmem>>) attributes {dimension_semantics = [], scalar_prefetch = 0 : i64, scratch_operands = 0 : i64, tpu.core_type = #tpu.core_type<tc>} {
    %c0 = arith.constant 0 : index
    %c0_0 = arith.constant 0 : index
    %0 = vector.load %arg0[%c0, %c0_0] : memref<16x16xbf16, #tpu.memory_space<vmem>>, vector<16x16xbf16>
    %c0_1 = arith.constant 0 : index
    %c0_2 = arith.constant 0 : index
    %1 = vector.load %arg2[%c0_1, %c0_2] : memref<16x128xbf16, #tpu.memory_space<vmem>>, vector<16x128xbf16>
    %cst = arith.constant dense<0.000000e+00> : vector<16x128xf32>
    %2 = tpu.matmul %0, %1, %cst {dimension_numbers = #tpu.dot_dimension_numbers<[1], [0], [0], [1], [0, 0, 1, 1], [], []>} : vector<16x16xbf16>, vector<16x128xbf16>, vector<16x128xf32> -> vector<16x128xf32>
    %3 = arith.truncf %2 : vector<16x128xf32> to vector<16x128xbf16>
    %4 = tpu.concatenate %3, %1 in 1 : vector<16x128xbf16>, vector<16x128xbf16> -> vector<16x256xbf16>
    %c0_3 = arith.constant 0 : index
    %c0_4 = arith.constant 0 : index
    %5 = vector.load %arg3[%c0_3, %c0_4] : memref<256x128xbf16, #tpu.memory_space<vmem>>, vector<256x128xbf16>
    %cst_5 = arith.constant dense<0.000000e+00> : vector<16x128xf32>
    %6 = tpu.matmul %4, %5, %cst_5 {dimension_numbers = #tpu.dot_dimension_numbers<[1], [0], [0], [1], [0, 0, 1, 1], [], []>} : vector<16x256xbf16>, vector<256x128xbf16>, vector<16x128xf32> -> vector<16x128xf32>
    %c0_6 = arith.constant 0 : index
    %c0_7 = arith.constant 0 : index
    %7 = vector.load %arg4[%c0_6, %c0_7] : memref<1x128xf32, #tpu.memory_space<vmem>>, vector<1x128xf32>
    %8 = vector.broadcast %7 : vector<1x128xf32> to vector<16x128xf32>
    %9 = arith.addf %6, %8 : vector<16x128xf32>
    %cst_8 = arith.constant 0.000000e+00 : f32
    %10 = vector.broadcast %cst_8 : f32 to vector<16x128xf32>
    %11 = arith.maximumf %9, %10 : vector<16x128xf32>
    %c0_9 = arith.constant 0 : index
    %c0_10 = arith.constant 0 : index
    %12 = vector.load %arg1[%c0_9, %c0_10] : memref<16x1xf32, #tpu.memory_space<vmem>>, vector<16x1xf32>
    %13 = vector.broadcast %12 : vector<16x1xf32> to vector<16x128xf32>
    %14 = arith.mulf %13, %11 : vector<16x128xf32>
    %15 = arith.truncf %14 : vector<16x128xf32> to vector<16x128xbf16>
    %16 = arith.truncf %11 : vector<16x128xf32> to vector<16x128xbf16>
    %17 = tpu.concatenate %15, %16 in 1 : vector<16x128xbf16>, vector<16x128xbf16> -> vector<16x256xbf16>
    %c0_11 = arith.constant 0 : index
    %c0_12 = arith.constant 0 : index
    %18 = vector.load %arg5[%c0_11, %c0_12] : memref<256x128xbf16, #tpu.memory_space<vmem>>, vector<256x128xbf16>
    %cst_13 = arith.constant dense<0.000000e+00> : vector<16x128xf32>
    %19 = tpu.matmul %17, %18, %cst_13 {dimension_numbers = #tpu.dot_dimension_numbers<[1], [0], [0], [1], [0, 0, 1, 1], [], []>} : vector<16x256xbf16>, vector<256x128xbf16>, vector<16x128xf32> -> vector<16x128xf32>
    %cst_14 = arith.constant dense<0.000000e+00> : vector<128xf32>
    %20 = vector.multi_reduction <add>, %19, %cst_14 [0] : vector<16x128xf32> to vector<128xf32>
    %21 = vector.shape_cast %20 : vector<128xf32> to vector<1x128xf32>
    %c0_15 = arith.constant 0 : index
    %c0_16 = arith.constant 0 : index
    %22 = vector.load %arg6[%c0_15, %c0_16] : memref<1x128xf32, #tpu.memory_space<vmem>>, vector<1x128xf32>
    %cst_17 = arith.constant 1.600000e+01 : f32
    %23 = vector.broadcast %cst_17 : f32 to vector<1x128xf32>
    %24 = arith.mulf %23, %22 : vector<1x128xf32>
    %25 = arith.addf %21, %24 : vector<1x128xf32>
    %c0_18 = arith.constant 0 : index
    %c0_19 = arith.constant 0 : index
    %26 = vector.load %arg7[%c0_18, %c0_19] : memref<1x128xf32, #tpu.memory_space<vmem>>, vector<1x128xf32>
    tpu.vector_store %arg7[%c0_18, %c0_19], %25 {strides = array<i32>} : memref<1x128xf32, #tpu.memory_space<vmem>>, vector<1x128xf32>,
    return
  }
}

</mosaic_0001>

<llo_original>
// kernel: gnn_forward.1
$region0: #{gnn_forward.1}
  #allocation0 [shape = 'u32[]', space=smem, size = 0x4, offset = 0x4, fixed_abs, tag = 'smem constant byte address 0x4 - core index']
  #allocation1 [shape = 'u32[144,128]{1,0:T(1,128)}', space=vmem, size = 0x12000, scoped, tag = 'internal scratch']
  %s0 = inlined_call_operand.vmem [shape: bf16[16,16], index: 0, kind: input, shape index: {}]
  %s1 = inlined_call_operand.vmem [shape: f32[16,1], index: 1, kind: input, shape index: {}]
  %s2 = inlined_call_operand.vmem [shape: bf16[16,128], index: 2, kind: input, shape index: {}]
  %s3 = inlined_call_operand.vmem [shape: bf16[256,128], index: 3, kind: input, shape index: {}]
  %s4 = inlined_call_operand.vmem [shape: f32[1,128], index: 4, kind: input, shape index: {}]
  %s5 = inlined_call_operand.vmem [shape: bf16[256,128], index: 5, kind: input, shape index: {}]
  %s6 = inlined_call_operand.vmem [shape: f32[1,128], index: 6, kind: input, shape index: {}]
  %s7 = inlined_call_operand.hbm [shape: f32[1,128], index: 7, kind: output, shape index: {}]
  %s8 = sld [smem:[#allocation0]]
  $region38: #{gnn_forward.1} parent=0
    _
  %s10 = ssub.s32 1, %s8
  %s11 = scalar_select 0, %s10, %s8
  $region1: #{gnn_forward.1} parent=0
    #allocation2 [shape = 'u8[512]{0}', space=vmem, size = 0x400, scoped, tag = 'output window, operand 0, single buffered']
    #allocation3 [shape = 's32[1]{0}', space=sflag, size = 0x4, scoped, tag = 'scoped memory for gnn_forward.1']
    %12 = vsyncpa [#allocation3], 0
    // Predicated region
    $region2: #{gnn_forward.1} parent=1 // pred_check
      _
    $region3: #{gnn_forward.1} parent=1 // pred_check_branch
      %14 = sbr.rel (0) target = $region5
    $region4: #{gnn_forward.1} parent=1 // pred_region
      _
    $region5: #{gnn_forward.1} parent=1 // pred_fallthru
      _
    // Predicated region
    $region6: #{gnn_forward.1} parent=1 // pred_check
      _
    $region7: #{gnn_forward.1} parent=1 // pred_check_branch
      %16 = sbr.rel (0) target = $region9
    $region8: #{gnn_forward.1} parent=1 // pred_region
      _
    $region9: #{gnn_forward.1} parent=1 // pred_fallthru
      _
    // Predicated region
    $region10: #{gnn_forward.1} parent=1 // pred_check
      _
    $region11: #{gnn_forward.1} parent=1 // pred_check_branch
      %18 = sbr.rel (0) target = $region13
    $region12: #{gnn_forward.1} parent=1 // pred_region
      _
    $region13: #{gnn_forward.1} parent=1 // pred_fallthru
      _
    // Predicated region
    $region14: #{gnn_forward.1} parent=1 // pred_check
      _
    $region15: #{gnn_forward.1} parent=1 // pred_check_branch
      %20 = sbr.rel (0) target = $region17
    $region16: #{gnn_forward.1} parent=1 // pred_region
      _
    $region17: #{gnn_forward.1} parent=1 // pred_fallthru
      _
    // Predicated region
    $region18: #{gnn_forward.1} parent=1 // pred_check
      _
    $region19: #{gnn_forward.1} parent=1 // pred_check_branch
      %22 = sbr.rel (0) target = $region21
    $region20: #{gnn_forward.1} parent=1 // pred_region
      _
    $region21: #{gnn_forward.1} parent=1 // pred_fallthru
      _
    // Predicated region
    $region22: #{gnn_forward.1} parent=1 // pred_check
      _
    $region23: #{gnn_forward.1} parent=1 // pred_check_branch
      %24 = sbr.rel (0) target = $region25
    $region24: #{gnn_forward.1} parent=1 // pred_region
      _
    $region25: #{gnn_forward.1} parent=1 // pred_fallthru
      _
    // Predicated region
    $region26: #{gnn_forward.1} parent=1 // pred_check
      _
    $region27: #{gnn_forward.1} parent=1 // pred_check_branch
      %26 = sbr.rel (0) target = $region29
    $region28: #{gnn_forward.1} parent=1 // pred_region
      _
    $region29: #{gnn_forward.1} parent=1 // pred_fallthru
      _
    %v28 = vld [vmem:[%s0] sm:$0xf]
    %v29 = vld [vmem:[%s0 + $0x4] sm:$0xf]
    %v30 = vld [vmem:[%s2] sm:$0xf]
    %v31 = vld [vmem:[%s2 + $0x4] sm:$0xf]
    %v34 = vunpack.c.l.b16 %v28
    %v35 = vunpack.c.l.b16 %v29
    %v36 = vpack.c.b16 %v35, %v34
    %v39 = vunpack.c.l.b16 %v30
    %v40 = vunpack.c.l.b16 %v31
    %v41 = vpack.c.b16 %v40, %v39
    %vm43 = vcmask 130048
    %v45 = vsel %vm43, %v36, 0
    %47 = vmatprep.subr.bf16.mxu0 0
    %48 = vmatpush1.bf16.msra.mxu0 %v41
    %49 = vmatprep.subr.bf16.mxu0 0
    %50 = vmatpush1.bf16.msra.mxu0 0
    %51 = vmatprep.subr.bf16.mxu0 0
    %52 = vmatpush1.bf16.msra.mxu0 0
    %53 = vmatprep.subr.bf16.mxu0 0
    %54 = vmatpush1.bf16.msra.mxu0 0
    %55 = vmatprep.subr.bf16.mxu0 0
    %56 = vmatpush1.bf16.msra.mxu0 0
    %57 = vmatprep.subr.bf16.mxu0 0
    %58 = vmatpush1.bf16.msra.mxu0 0
    %59 = vmatprep.subr.bf16.mxu0 0
    %60 = vmatpush1.bf16.msra.mxu0 0
    %61 = vmatprep.subr.bf16.mxu0 0
    %62 = vmatpush1.bf16.msra.mxu0 0
    %63 = vmatprep.subr.bf16.mxu0 0
    %64 = vmatpush1.bf16.msra.mxu0 0
    %65 = vmatprep.subr.bf16.mxu0 0
    %66 = vmatpush1.bf16.msra.mxu0 0
    %67 = vmatprep.subr.bf16.mxu0 0
    %68 = vmatpush1.bf16.msra.mxu0 0
    %69 = vmatprep.subr.bf16.mxu0 0
    %70 = vmatpush1.bf16.msra.mxu0 0
    %71 = vmatprep.subr.bf16.mxu0 0
    %72 = vmatpush1.bf16.msra.mxu0 0
    %73 = vmatprep.subr.bf16.mxu0 0
    %74 = vmatpush1.bf16.msra.mxu0 0
    %75 = vmatprep.subr.bf16.mxu0 0
    %76 = vmatpush1.bf16.msra.mxu0 0
    %77 = vmatprep.subr.bf16.mxu0 0
    %78 = vmatpush1.bf16.msra.mxu0 0
    %79 = vmatprep.mubr.bf16.mxu0 0
    %80 = vmatmul.mubr.bf16.gmra.mrb[0].mxu0 %v45
    %v81 = vpop.f32.mrb[0].mxu0
    %v82 = vadd.f32 0.0, %v81
    %v83 = vpop.f32.mrb[0].mxu0
    %v84 = vpop.f32.mrb[0].mxu0
    %v85 = vadd.f32 0.0, %v84
    %v86 = vpop.f32.mrb[0].mxu0
    %87 = vdwg.mxu0
    %v88 = vpack.c.bf16 %v85, %v82
    %v89 = vld [vmem:[%s3] sm:$0xf]
    %v90 = vld [vmem:[%s3 + $0x4] sm:$0xf]
    %v91 = vld [vmem:[%s3 + $0x8] sm:$0xf]
    %v92 = vld [vmem:[%s3 + $0xc] sm:$0xf]
    %v93 = vld [vmem:[%s3 + $0x10] sm:$0xf]
    %v94 = vld [vmem:[%s3 + $0x14] sm:$0xf]
    %v95 = vld [vmem:[%s3 + $0x18] sm:$0xf]
    %v96 = vld [vmem:[%s3 + $0x1c] sm:$0xf]
    %v97 = vld [vmem:[%s3 + $0x20] sm:$0xf]
    %v98 = vld [vmem:[%s3 + $0x24] sm:$0xf]
    %v99 = vld [vmem:[%s3 + $0x28] sm:$0xf]
    %v100 = vld [vmem:[%s3 + $0x2c] sm:$0xf]
    %v101 = vld [vmem:[%s3 + $0x30] sm:$0xf]
    %v102 = vld [vmem:[%s3 + $0x34] sm:$0xf]
    %v103 = vld [vmem:[%s3 + $0x38] sm:$0xf]
    %v104 = vld [vmem:[%s3 + $0x3c] sm:$0xf]
    %v105 = vld [vmem:[%s3 + $0x40] sm:$0xf]
    %v106 = vld [vmem:[%s3 + $0x44] sm:$0xf]
    %v107 = vld [vmem:[%s3 + $0x48] sm:$0xf]
    %v108 = vld [vmem:[%s3 + $0x4c] sm:$0xf]
    %v109 = vld [vmem:[%s3 + $0x50] sm:$0xf]
    %v110 = vld [vmem:[%s3 + $0x54] sm:$0xf]
    %v111 = vld [vmem:[%s3 + $0x58] sm:$0xf]
    %v112 = vld [vmem:[%s3 + $0x5c] sm:$0xf]
    %v113 = vld [vmem:[%s3 + $0x60] sm:$0xf]
    %v114 = vld [vmem:[%s3 + $0x64] sm:$0xf]
    %v115 = vld [vmem:[%s3 + $0x68] sm:$0xf]
    %v116 = vld [vmem:[%s3 + $0x6c] sm:$0xf]
    %v117 = vld [vmem:[%s3 + $0x70] sm:$0xf]
    %v118 = vld [vmem:[%s3 + $0x74] sm:$0xf]
    %v119 = vld [vmem:[%s3 + $0x78] sm:$0xf]
    %v120 = vld [vmem:[%s3 + $0x7c] sm:$0xf]
    %v121 = vld [vmem:[%s4] sm:$0x1]
    %v123 = vlaneseq
    %v124 = vshrl.u32 %v123, 7
    %v125 = vsub.s32 0, %v124
    %v126 = vrot.slane %v121, %v125
    %v160 = vunpack.c.l.b16 %v89
    %v161 = vunpack.c.l.b16 %v90
    %v162 = vunpack.c.l.b16 %v91
    %v163 = vunpack.c.l.b16 %v92
    %v164 = vunpack.c.l.b16 %v93
    %v165 = vunpack.c.l.b16 %v94
    %v166 = vunpack.c.l.b16 %v95
    %v167 = vunpack.c.l.b16 %v96
    %v168 = vunpack.c.l.b16 %v97
    %v169 = vunpack.c.l.b16 %v98
    %v170 = vunpack.c.l.b16 %v99
    %v171 = vunpack.c.l.b16 %v100
    %v172 = vunpack.c.l.b16 %v101
    %v173 = vunpack.c.l.b16 %v102
    %v174 = vunpack.c.l.b16 %v103
    %v175 = vunpack.c.l.b16 %v104
    %v176 = vunpack.c.l.b16 %v105
    %v177 = vunpack.c.l.b16 %v106
    %v178 = vunpack.c.l.b16 %v107
    %v179 = vunpack.c.l.b16 %v108
    %v180 = vunpack.c.l.b16 %v109
    %v181 = vunpack.c.l.b16 %v110
    %v182 = vunpack.c.l.b16 %v111
    %v183 = vunpack.c.l.b16 %v112
    %v184 = vunpack.c.l.b16 %v113
    %v185 = vunpack.c.l.b16 %v114
    %v186 = vunpack.c.l.b16 %v115
    %v187 = vunpack.c.l.b16 %v116
    %v188 = vunpack.c.l.b16 %v117
    %v189 = vunpack.c.l.b16 %v118
    %v190 = vunpack.c.l.b16 %v119
    %v191 = vunpack.c.l.b16 %v120
    %v192 = vpack.c.b16 %v161, %v160
    %v193 = vpack.c.b16 %v163, %v162
    %v194 = vpack.c.b16 %v165, %v164
    %v195 = vpack.c.b16 %v167, %v166
    %v196 = vpack.c.b16 %v169, %v168
    %v197 = vpack.c.b16 %v171, %v170
    %v198 = vpack.c.b16 %v173, %v172
    %v199 = vpack.c.b16 %v175, %v174
    %v200 = vpack.c.b16 %v177, %v176
    %v201 = vpack.c.b16 %v179, %v178
    %v202 = vpack.c.b16 %v181, %v180
    %v203 = vpack.c.b16 %v183, %v182
    %v204 = vpack.c.b16 %v185, %v184
    %v205 = vpack.c.b16 %v187, %v186
    %v206 = vpack.c.b16 %v189, %v188
    %v207 = vpack.c.b16 %v191, %v190
    %224 = vmatprep.subr.bf16.mxu0 0
    %225 = vmatpush1.bf16.msra.mxu0 %v192
    %226 = vmatprep.subr.bf16.mxu0 0
    %227 = vmatpush1.bf16.msra.mxu0 %v193
    %228 = vmatprep.subr.bf16.mxu0 0
    %229 = vmatpush1.bf16.msra.mxu0 %v194
    %230 = vmatprep.subr.bf16.mxu0 0
    %231 = vmatpush1.bf16.msra.mxu0 %v195
    %232 = vmatprep.subr.bf16.mxu0 0
    %233 = vmatpush1.bf16.msra.mxu0 %v196
    %234 = vmatprep.subr.bf16.mxu0 0
    %235 = vmatpush1.bf16.msra.mxu0 %v197
    %236 = vmatprep.subr.bf16.mxu0 0
    %237 = vmatpush1.bf16.msra.mxu0 %v198
    %238 = vmatprep.subr.bf16.mxu0 0
    %239 = vmatpush1.bf16.msra.mxu0 %v199
    %240 = vmatprep.subr.bf16.mxu0 0
    %241 = vmatpush1.bf16.msra.mxu0 %v200
    %242 = vmatprep.subr.bf16.mxu0 0
    %243 = vmatpush1.bf16.msra.mxu0 %v201
    %244 = vmatprep.subr.bf16.mxu0 0
    %245 = vmatpush1.bf16.msra.mxu0 %v202
    %246 = vmatprep.subr.bf16.mxu0 0
    %247 = vmatpush1.bf16.msra.mxu0 %v203
    %248 = vmatprep.subr.bf16.mxu0 0
    %249 = vmatpush1.bf16.msra.mxu0 %v204
    %250 = vmatprep.subr.bf16.mxu0 0
    %251 = vmatpush1.bf16.msra.mxu0 %v205
    %252 = vmatprep.subr.bf16.mxu0 0
    %253 = vmatpush1.bf16.msra.mxu0 %v206
    %254 = vmatprep.subr.bf16.mxu0 0
    %255 = vmatpush1.bf16.msra.mxu0 %v207
    %256 = vmatprep.mubr.bf16.mxu0 %v41
    %257 = vmatmul.mubr.bf16.gmra.mrb[0].mxu0 %v88
    %v258 = vpop.f32.mrb[0].mxu0
    %v259 = vadd.f32 %v126, %v258
    %v260 = vpop.f32.mrb[0].mxu0
    %v261 = vpop.f32.mrb[0].mxu0
    %v262 = vadd.f32 %v126, %v261
    %v263 = vpop.f32.mrb[0].mxu0
    %264 = vdwg.mxu0
    %v265 = vmax.f32 %v259, 0.0
    %v266 = vmax.f32 %v262, 0.0
    %v267 = vld [vmem:[%s1] sm:$0xff]
    %v268 = vld [vmem:[%s1 + $0x8] sm:$0xff]
    %270 = vset.pattern.permute.xlu0 0
    %271 = vperm.xlu0 %270, %v267
    %v272 = vpop.permute.xlu0 %271
    %275 = vset.pattern.permute.xlu0 0
    %276 = vperm.xlu0 %275, %v268
    %v277 = vpop.permute.xlu0 %276
    %v279 = vmul.f32 %v272, %v265
    %v280 = vmul.f32 %v277, %v266
    %v281 = vpack.c.bf16 %v280, %v279
    %v282 = vpack.c.bf16 %v266, %v265
    %v283 = vld [vmem:[%s5] sm:$0xf]
    %v284 = vld [vmem:[%s5 + $0x4] sm:$0xf]
    %v285 = vld [vmem:[%s5 + $0x8] sm:$0xf]
    %v286 = vld [vmem:[%s5 + $0xc] sm:$0xf]
    %v287 = vld [vmem:[%s5 + $0x10] sm:$0xf]
    %v288 = vld [vmem:[%s5 + $0x14] sm:$0xf]
    %v289 = vld [vmem:[%s5 + $0x18] sm:$0xf]
    %v290 = vld [vmem:[%s5 + $0x1c] sm:$0xf]
    %v291 = vld [vmem:[%s5 + $0x20] sm:$0xf]
    %v292 = vld [vmem:[%s5 + $0x24] sm:$0xf]
    %v293 = vld [vmem:[%s5 + $0x28] sm:$0xf]
    %v294 = vld [vmem:[%s5 + $0x2c] sm:$0xf]
    %v295 = vld [vmem:[%s5 + $0x30] sm:$0xf]
    %v296 = vld [vmem:[%s5 + $0x34] sm:$0xf]
    %v297 = vld [vmem:[%s5 + $0x38] sm:$0xf]
    %v298 = vld [vmem:[%s5 + $0x3c] sm:$0xf]
    %v299 = vld [vmem:[%s5 + $0x40] sm:$0xf]
    %v300 = vld [vmem:[%s5 + $0x44] sm:$0xf]
    %v301 = vld [vmem:[%s5 + $0x48] sm:$0xf]
    %v302 = vld [vmem:[%s5 + $0x4c] sm:$0xf]
    %v303 = vld [vmem:[%s5 + $0x50] sm:$0xf]
    %v304 = vld [vmem:[%s5 + $0x54] sm:$0xf]
    %v305 = vld [vmem:[%s5 + $0x58] sm:$0xf]
    %v306 = vld [vmem:[%s5 + $0x5c] sm:$0xf]
    %v307 = vld [vmem:[%s5 + $0x60] sm:$0xf]
    %v308 = vld [vmem:[%s5 + $0x64] sm:$0xf]
    %v309 = vld [vmem:[%s5 + $0x68] sm:$0xf]
    %v310 = vld [vmem:[%s5 + $0x6c] sm:$0xf]
    %v311 = vld [vmem:[%s5 + $0x70] sm:$0xf]
    %v312 = vld [vmem:[%s5 + $0x74] sm:$0xf]
    %v313 = vld [vmem:[%s5 + $0x78] sm:$0xf]
    %v314 = vld [vmem:[%s5 + $0x7c] sm:$0xf]
    %v347 = vunpack.c.l.b16 %v283
    %v348 = vunpack.c.l.b16 %v284
    %v349 = vunpack.c.l.b16 %v285
    %v350 = vunpack.c.l.b16 %v286
    %v351 = vunpack.c.l.b16 %v287
    %v352 = vunpack.c.l.b16 %v288
    %v353 = vunpack.c.l.b16 %v289
    %v354 = vunpack.c.l.b16 %v290
    %v355 = vunpack.c.l.b16 %v291
    %v356 = vunpack.c.l.b16 %v292
    %v357 = vunpack.c.l.b16 %v293
    %v358 = vunpack.c.l.b16 %v294
    %v359 = vunpack.c.l.b16 %v295
    %v360 = vunpack.c.l.b16 %v296
    %v361 = vunpack.c.l.b16 %v297
    %v362 = vunpack.c.l.b16 %v298
    %v363 = vunpack.c.l.b16 %v299
    %v364 = vunpack.c.l.b16 %v300
    %v365 = vunpack.c.l.b16 %v301
    %v366 = vunpack.c.l.b16 %v302
    %v367 = vunpack.c.l.b16 %v303
    %v368 = vunpack.c.l.b16 %v304
    %v369 = vunpack.c.l.b16 %v305
    %v370 = vunpack.c.l.b16 %v306
    %v371 = vunpack.c.l.b16 %v307
    %v372 = vunpack.c.l.b16 %v308
    %v373 = vunpack.c.l.b16 %v309
    %v374 = vunpack.c.l.b16 %v310
    %v375 = vunpack.c.l.b16 %v311
    %v376 = vunpack.c.l.b16 %v312
    %v377 = vunpack.c.l.b16 %v313
    %v378 = vunpack.c.l.b16 %v314
    %v379 = vpack.c.b16 %v348, %v347
    %v380 = vpack.c.b16 %v350, %v349
    %v381 = vpack.c.b16 %v352, %v351
    %v382 = vpack.c.b16 %v354, %v353
    %v383 = vpack.c.b16 %v356, %v355
    %v384 = vpack.c.b16 %v358, %v357
    %v385 = vpack.c.b16 %v360, %v359
    %v386 = vpack.c.b16 %v362, %v361
    %v387 = vpack.c.b16 %v364, %v363
    %v388 = vpack.c.b16 %v366, %v365
    %v389 = vpack.c.b16 %v368, %v367
    %v390 = vpack.c.b16 %v370, %v369
    %v391 = vpack.c.b16 %v372, %v371
    %v392 = vpack.c.b16 %v374, %v373
    %v393 = vpack.c.b16 %v376, %v375
    %v394 = vpack.c.b16 %v378, %v377
    %411 = vmatprep.subr.bf16.mxu0 0
    %412 = vmatpush1.bf16.msra.mxu0 %v379
    %413 = vmatprep.subr.bf16.mxu0 0
    %414 = vmatpush1.bf16.msra.mxu0 %v380
    %415 = vmatprep.subr.bf16.mxu0 0
    %416 = vmatpush1.bf16.msra.mxu0 %v381
    %417 = vmatprep.subr.bf16.mxu0 0
    %418 = vmatpush1.bf16.msra.mxu0 %v382
    %419 = vmatprep.subr.bf16.mxu0 0
    %420 = vmatpush1.bf16.msra.mxu0 %v383
    %421 = vmatprep.subr.bf16.mxu0 0
    %422 = vmatpush1.bf16.msra.mxu0 %v384
    %423 = vmatprep.subr.bf16.mxu0 0
    %424 = vmatpush1.bf16.msra.mxu0 %v385
    %425 = vmatprep.subr.bf16.mxu0 0
    %426 = vmatpush1.bf16.msra.mxu0 %v386
    %427 = vmatprep.subr.bf16.mxu0 0
    %428 = vmatpush1.bf16.msra.mxu0 %v387
    %429 = vmatprep.subr.bf16.mxu0 0
    %430 = vmatpush1.bf16.msra.mxu0 %v388
    %431 = vmatprep.subr.bf16.mxu0 0
    %432 = vmatpush1.bf16.msra.mxu0 %v389
    %433 = vmatprep.subr.bf16.mxu0 0
    %434 = vmatpush1.bf16.msra.mxu0 %v390
    %435 = vmatprep.subr.bf16.mxu0 0
    %436 = vmatpush1.bf16.msra.mxu0 %v391
    %437 = vmatprep.subr.bf16.mxu0 0
    %438 = vmatpush1.bf16.msra.mxu0 %v392
    %439 = vmatprep.subr.bf16.mxu0 0
    %440 = vmatpush1.bf16.msra.mxu0 %v393
    %441 = vmatprep.subr.bf16.mxu0 0
    %442 = vmatpush1.bf16.msra.mxu0 %v394
    %443 = vmatprep.mubr.bf16.mxu0 %v282
    %444 = vmatmul.mubr.bf16.gmra.mrb[0].mxu0 %v281
    %v445 = vpop.f32.mrb[0].mxu0
    %v446 = vadd.f32 0.0, %v445
    %v447 = vpop.f32.mrb[0].mxu0
    %v448 = vpop.f32.mrb[0].mxu0
    %v449 = vadd.f32 0.0, %v448
    %v450 = vpop.f32.mrb[0].mxu0
    %451 = vdwg.mxu0
    %v452 = vadd.f32 %v446, %v449
    %v453 = vrot.slane %v452, 4
    %v454 = vadd.f32 %v452, %v453
    %v455 = vrot.slane %v454, 2
    %v456 = vadd.f32 %v454, %v455
    %v457 = vrot.slane %v456, 1
    %v458 = vadd.f32 %v456, %v457
    %v459 = vld [vmem:[%s6] sm:$0x1]
    %v460 = vmul.f32 %v459, 16.0
    %v461 = vadd.f32 %v458, %v460
    %462 = vst [vmem:[#allocation2] sm:$0x1] %v461
    // Predicated region
    $region30: #{gnn_forward.1} parent=1 // pred_check
      _
    $region31: #{gnn_forward.1} parent=1 // pred_check_branch
      %464 = sbr.rel (0) target = $region33
    $region32: #{gnn_forward.1} parent=1 // pred_region
      %s466 = ssub.s32 16, 16
      %467 = vsyncadd [#allocation3], %s466
      %s469 = sshll.u32 [#allocation2], 4
      %s470 = int_to_ptr.vmem [resolvable:$true] %s469
      %472 = dma.vmem_to_hbm [thread:$0]  %s470, 16, %s7, [#allocation3]
    $region33: #{gnn_forward.1} parent=1 // pred_fallthru
      _
    // Predicated region
    $region34: #{gnn_forward.1} parent=1 // pred_check
      _
    $region35: #{gnn_forward.1} parent=1 // pred_check_branch
      %474 = sbr.rel (0) target = $region37
    $region36: #{gnn_forward.1} parent=1 // pred_region
      %475 = dma.done [#allocation3], 16
    $region37: #{gnn_forward.1} parent=1 // pred_fallthru
      _
    %476 = vsyncpa [#allocation3], 1

</llo_original>
